<compile_context>
chip_gen: v7x
topology: tpu7x:2x2x1
jax: 0.10.0
libtpu: 0.0.40
codegen_flags: <defaults>
</compile_context>

<pallas_src>
import jax
import jax.numpy as jnp
from jax.experimental import pallas as pl
from jax.experimental.pallas import tpu as pltpu


def _pick_batch_tile() -> int:
    """Per-generation batch tile for f32-streamed x (review budget)."""
    try:
        kind = jax.devices()[0].device_kind.lower()
    except Exception:  # pragma: no cover - defensive
        kind = ""
    if "v5 lite" in kind or "v5e" in kind or "v5litepod" in kind:
        return 2048  # v5e: 16 MiB scoped default; keep tiles modest
    return 4096      # v6e / v7x (and default)


def fcnn_kernel(x_ref, w1_ref, b1_ref, w2_ref, b2_ref, o_ref):
    # x_ref : (TB, 784) f32    w1_ref: (784, 64) bf16   b1_ref: (1, 64) f32
    # w2_ref: (64, 10)  f32    b2_ref: (1, 10)   f32    o_ref : (TB, 10) f32

    # fc1 + ReLU: cast x to bf16 in-kernel (hidden under DMA), bf16 MXU operands,
    # f32 accumulation.
    x_bf16 = x_ref[...].astype(jnp.bfloat16)
    h = jnp.dot(x_bf16, w1_ref[...], preferred_element_type=jnp.float32)
    h = jnp.maximum(h + b1_ref[...], 0.0)

    # fc2 (tiny 64x10 matmul, keep f32).
    logits = jnp.dot(h, w2_ref[...], preferred_element_type=jnp.float32) + b2_ref[...]

    # softmax over dim=1 (numerically stable, same semantics as nn.Softmax(dim=1)).
    m = jnp.max(logits, axis=1, keepdims=True)
    e = jnp.exp(logits - m)
    denom = jnp.sum(e, axis=1, keepdims=True)
    # Exact reciprocal: still hidden under the DMA, rows sum to 1 tightly.
    o_ref[...] = e * pl.reciprocal(denom)


def fcnn_forward(x, w1, b1, w2, b2):
    """x: (B, 1, 28, 28) or anything reshapeable to (-1, 784). Returns (B, 10) f32."""
    # x.view(-1, 784) — NO standalone dtype cast here (extra HBM pass); the
    # bf16 cast happens inside the kernel body.
    x2d = x.reshape(-1, 784)
    if x2d.dtype != jnp.float32:
        x2d = x2d.astype(jnp.float32)
    w1_bf16 = w1.astype(jnp.bfloat16)  # tiny one-time cast (~100 KiB)
    B = x2d.shape[0]

    # Batch tile: large when possible; otherwise use the full (small) batch so
    # the block shape equals the array dims and satisfies the (8,128) rule.
    tb_max = _pick_batch_tile()
    tb = tb_max if B >= tb_max else B
    grid = (pl.cdiv(B, tb),)

    # Explicit scoped-VMEM budget: x/out double buffers + resident weights + margin.
    weights_bytes = 784 * 64 * 2 + 64 * 4 + 64 * 10 * 4 + 10 * 4
    vmem_bytes = 2 * tb * 784 * 4 + 2 * tb * 16 * 4 + weights_bytes + (8 << 20)

    cost = pl.CostEstimate(
        flops=2 * B * 784 * 64 + 2 * B * 64 * 10,
        transcendentals=B * 10,
        bytes_accessed=(B * 784 * 4            # x (f32, read once)
                        + 784 * 64 * 2         # w1 (bf16)
                        + 64 * 4 + 64 * 10 * 4 + 10 * 4  # b1, w2, b2 (f32)
                        + B * 10 * 4),         # out (f32)
    )

    return pl.pallas_call(
        fcnn_kernel,
        out_shape=jax.ShapeDtypeStruct((B, 10), jnp.float32),
        grid_spec=pltpu.PrefetchScalarGridSpec(
            num_scalar_prefetch=0,
            grid=grid,
            in_specs=[
                pl.BlockSpec((tb, 784), lambda i: (i, 0)),   # x: batch-tiled, pipelined
                pl.BlockSpec((784, 64), lambda i: (0, 0)),   # w1: resident in VMEM
                pl.BlockSpec((1, 64), lambda i: (0, 0)),     # b1: resident
                pl.BlockSpec((64, 10), lambda i: (0, 0)),    # w2: resident
                pl.BlockSpec((1, 10), lambda i: (0, 0)),     # b2: resident
            ],
            out_specs=pl.BlockSpec((tb, 10), lambda i: (i, 0)),
        ),
        compiler_params=pltpu.CompilerParams(
            dimension_semantics=("parallel",),   # shard batch tiles across TCs (v7x)
            vmem_limit_bytes=int(vmem_bytes),
        ),
        cost_estimate=cost,
    )(x2d, w1_bf16, b1, w2, b2)


def init_params(key):
    """Deterministic synthetic parameters with the same shapes as the module."""
    k1, k2, k3, k4 = jax.random.split(key, 4)
    # nn.Linear(784, 64): weight (64, 784) -> stored transposed (784, 64)
    w1 = jax.random.uniform(k1, (784, 64), jnp.float32, -1.0, 1.0) * (1.0 / 784.0) ** 0.5
    b1 = jax.random.uniform(k2, (1, 64), jnp.float32, -1.0, 1.0) * (1.0 / 784.0) ** 0.5
    # nn.Linear(64, 10): weight (10, 64) -> stored transposed (64, 10)
    w2 = jax.random.uniform(k3, (64, 10), jnp.float32, -1.0, 1.0) * (1.0 / 64.0) ** 0.5
    b2 = jax.random.uniform(k4, (1, 10), jnp.float32, -1.0, 1.0) * (1.0 / 64.0) ** 0.5
    return w1, b1, w2, b2


if __name__ == "__main__":
    key = jax.random.PRNGKey(0)
    kx, kp = jax.random.split(key)

    # Small MNIST-like batch: (B=2, C=1, H=28, W=28) NCHW
    x = jax.random.normal(kx, (2, 1, 28, 28), jnp.float32)
    w1, b1, w2, b2 = init_params(kp)

    out = fcnn_forward(x, w1, b1, w2, b2)
    out = jax.block_until_ready(out)

    # Pure-JAX reference (bf16 x/w1 in fc1 to match kernel numerics).
    x2d = x.reshape(-1, 784)
    h_ref = jnp.maximum(
        jnp.dot(x2d.astype(jnp.bfloat16), w1.astype(jnp.bfloat16),
                preferred_element_type=jnp.float32) + b1, 0.0)
    logits_ref = jnp.dot(h_ref, w2, preferred_element_type=jnp.float32) + b2
    probs_ref = jax.nn.softmax(logits_ref, axis=1)

    assert out.shape == (2, 10)
    assert jnp.allclose(jnp.sum(out, axis=1), 1.0, atol=1e-3)
    assert bool(jnp.all(out >= 0.0))
    assert jnp.allclose(out, probs_ref, atol=2e-2, rtol=2e-2)

    print("KERNEL_OK")
</pallas_src>

<mosaic_0001>
module attributes {stable_mosaic.version = 11 : i64} {
  func.func @fcnn_kernel(%arg0: i32, %arg1: memref<2x784xf32, #tpu.memory_space<vmem>>, %arg2: memref<784x64xbf16, #tpu.memory_space<vmem>>, %arg3: memref<1x64xf32, #tpu.memory_space<vmem>>, %arg4: memref<64x10xf32, #tpu.memory_space<vmem>>, %arg5: memref<1x10xf32, #tpu.memory_space<vmem>>, %arg6: memref<2x10xf32, #tpu.memory_space<vmem>>) attributes {dimension_semantics = [#tpu.dimension_semantics<parallel>], iteration_bounds = array<i64: 1>, scalar_prefetch = 0 : i64, scratch_operands = 0 : i64, tpu.core_type = #tpu.core_type<tc>, window_params = [{transform_indices = @transform_0, window_bounds = array<i64: 2, 784>}, {pipeline_mode = #tpu.pipeline_mode<synchronous>, transform_indices = @transform_1, window_bounds = array<i64: 784, 64>}, {pipeline_mode = #tpu.pipeline_mode<synchronous>, transform_indices = @transform_2, window_bounds = array<i64: 1, 64>}, {pipeline_mode = #tpu.pipeline_mode<synchronous>, transform_indices = @transform_3, window_bounds = array<i64: 64, 10>}, {pipeline_mode = #tpu.pipeline_mode<synchronous>, transform_indices = @transform_4, window_bounds = array<i64: 1, 10>}, {transform_indices = @transform_5, window_bounds = array<i64: 2, 10>}]} {
    %c0 = arith.constant 0 : index
    %c0_0 = arith.constant 0 : index
    %0 = vector.load %arg1[%c0, %c0_0] : memref<2x784xf32, #tpu.memory_space<vmem>>, vector<2x784xf32>
    %1 = arith.truncf %0 : vector<2x784xf32> to vector<2x784xbf16>
    %c0_1 = arith.constant 0 : index
    %c0_2 = arith.constant 0 : index
    %2 = vector.load %arg2[%c0_1, %c0_2] : memref<784x64xbf16, #tpu.memory_space<vmem>>, vector<784x64xbf16>
    %cst = arith.constant dense<0.000000e+00> : vector<2x64xf32>
    %3 = tpu.matmul %1, %2, %cst {dimension_numbers = #tpu.dot_dimension_numbers<[1], [0], [0], [1], [0, 0, 1, 1], [], []>} : vector<2x784xbf16>, vector<784x64xbf16>, vector<2x64xf32> -> vector<2x64xf32>
    %c0_3 = arith.constant 0 : index
    %c0_4 = arith.constant 0 : index
    %4 = vector.load %arg3[%c0_3, %c0_4] : memref<1x64xf32, #tpu.memory_space<vmem>>, vector<1x64xf32>
    %5 = vector.broadcast %4 : vector<1x64xf32> to vector<2x64xf32>
    %6 = arith.addf %3, %5 : vector<2x64xf32>
    %cst_5 = arith.constant 0.000000e+00 : f32
    %7 = vector.broadcast %cst_5 : f32 to vector<2x64xf32>
    %8 = arith.maximumf %6, %7 : vector<2x64xf32>
    %c0_6 = arith.constant 0 : index
    %c0_7 = arith.constant 0 : index
    %9 = vector.load %arg4[%c0_6, %c0_7] : memref<64x10xf32, #tpu.memory_space<vmem>>, vector<64x10xf32>
    %cst_8 = arith.constant dense<0.000000e+00> : vector<2x10xf32>
    %10 = tpu.matmul %8, %9, %cst_8 {dimension_numbers = #tpu.dot_dimension_numbers<[1], [0], [0], [1], [0, 0, 1, 1], [], []>} : vector<2x64xf32>, vector<64x10xf32>, vector<2x10xf32> -> vector<2x10xf32>
    %c0_9 = arith.constant 0 : index
    %c0_10 = arith.constant 0 : index
    %11 = vector.load %arg5[%c0_9, %c0_10] : memref<1x10xf32, #tpu.memory_space<vmem>>, vector<1x10xf32>
    %12 = vector.broadcast %11 : vector<1x10xf32> to vector<2x10xf32>
    %13 = arith.addf %10, %12 : vector<2x10xf32>
    %cst_11 = arith.constant dense<0xFF800000> : vector<2xf32>
    %14 = vector.multi_reduction <maximumf>, %13, %cst_11 [1] : vector<2x10xf32> to vector<2xf32>
    %15 = vector.shape_cast %14 : vector<2xf32> to vector<2x1xf32>
    %16 = vector.broadcast %15 : vector<2x1xf32> to vector<2x10xf32>
    %17 = arith.subf %13, %16 : vector<2x10xf32>
    %18 = math.exp %17 : vector<2x10xf32>
    %cst_12 = arith.constant dense<0.000000e+00> : vector<2xf32>
    %19 = vector.multi_reduction <add>, %18, %cst_12 [1] : vector<2x10xf32> to vector<2xf32>
    %20 = vector.shape_cast %19 : vector<2xf32> to vector<2x1xf32>
    %21 = tpu.reciprocal %20 : vector<2x1xf32> -> vector<2x1xf32>
    %22 = vector.broadcast %21 : vector<2x1xf32> to vector<2x10xf32>
    %23 = arith.mulf %18, %22 : vector<2x10xf32>
    %c0_13 = arith.constant 0 : index
    %c0_14 = arith.constant 0 : index
    %24 = vector.load %arg6[%c0_13, %c0_14] : memref<2x10xf32, #tpu.memory_space<vmem>>, vector<2x10xf32>
    tpu.vector_store %arg6[%c0_13, %c0_14], %23 {strides = array<i32>} : memref<2x10xf32, #tpu.memory_space<vmem>>, vector<2x10xf32>,
    return
  }
  func.func @transform_0(%arg0: i32) -> (i32, i32) {
    %c0_i32 = arith.constant 0 : i32
    %c0_i32_0 = arith.constant 0 : i32
    return %arg0, %c0_i32 : i32, i32
  }
  func.func @transform_1(%arg0: i32) -> (i32, i32) {
    %c0_i32 = arith.constant 0 : i32
    %c0_i32_0 = arith.constant 0 : i32
    %c0_i32_1 = arith.constant 0 : i32
    return %c0_i32, %c0_i32_0 : i32, i32
  }
  func.func @transform_2(%arg0: i32) -> (i32, i32) {
    %c0_i32 = arith.constant 0 : i32
    %c0_i32_0 = arith.constant 0 : i32
    %c0_i32_1 = arith.constant 0 : i32
    return %c0_i32, %c0_i32_0 : i32, i32
  }
  func.func @transform_3(%arg0: i32) -> (i32, i32) {
    %c0_i32 = arith.constant 0 : i32
    %c0_i32_0 = arith.constant 0 : i32
    %c0_i32_1 = arith.constant 0 : i32
    return %c0_i32, %c0_i32_0 : i32, i32
  }
  func.func @transform_4(%arg0: i32) -> (i32, i32) {
    %c0_i32 = arith.constant 0 : i32
    %c0_i32_0 = arith.constant 0 : i32
    %c0_i32_1 = arith.constant 0 : i32
    return %c0_i32, %c0_i32_0 : i32, i32
  }
  func.func @transform_5(%arg0: i32) -> (i32, i32) {
    %c0_i32 = arith.constant 0 : i32
    %c0_i32_0 = arith.constant 0 : i32
    return %arg0, %c0_i32 : i32, i32
  }
}

</mosaic_0001>

<llo_original>
// kernel: tpu_custom_call.1
$region0: #{tpu_custom_call.1}
  #allocation0 [shape = 'u32[]', space=smem, size = 0x4, offset = 0x4, fixed_abs, tag = 'smem constant byte address 0x4 - core index']
  #allocation1 [shape = 'u32[144,128]{1,0:T(1,128)}', space=vmem, size = 0x12000, scoped, tag = 'internal scratch']
  %s0 = inlined_call_operand.vmem [shape: f32[2,784], index: 0, kind: input, shape index: {}]
  %s1 = inlined_call_operand.vmem [shape: bf16[784,64], index: 1, kind: input, shape index: {}]
  %s2 = inlined_call_operand.vmem [shape: f32[1,64], index: 2, kind: input, shape index: {}]
  %s3 = inlined_call_operand.vmem [shape: f32[64,10], index: 3, kind: input, shape index: {}]
  %s4 = inlined_call_operand.vmem [shape: f32[1,10], index: 4, kind: input, shape index: {}]
  %s5 = inlined_call_operand.hbm [shape: f32[2,10], index: 5, kind: output, shape index: {}]
  %s6 = sld [smem:[#allocation0]]
  $region30: #{tpu_custom_call.1} parent=0
    _
  %s8 = ssub.s32 1, %s6
  %s9 = scalar_select 0, %s8, %s6
  $region1: #{tpu_custom_call.1} parent=0
    #allocation2 [shape = 'u8[1024]{0}', space=vmem, size = 0x400, scoped, tag = 'output window, operand 0, single buffered']
    #allocation3 [shape = 's32[1]{0}', space=sflag, size = 0x4, scoped, tag = 'scoped memory for tpu_custom_call.1']
    %10 = vsyncpa [#allocation3], 0
    // Predicated region
    $region2: #{tpu_custom_call.1} parent=1 // pred_check
      _
    $region3: #{tpu_custom_call.1} parent=1 // pred_check_branch
      %12 = sbr.rel (0) target = $region5
    $region4: #{tpu_custom_call.1} parent=1 // pred_region
      _
    $region5: #{tpu_custom_call.1} parent=1 // pred_fallthru
      _
    // Predicated region
    $region6: #{tpu_custom_call.1} parent=1 // pred_check
      _
    $region7: #{tpu_custom_call.1} parent=1 // pred_check_branch
      %14 = sbr.rel (0) target = $region9
    $region8: #{tpu_custom_call.1} parent=1 // pred_region
      _
    $region9: #{tpu_custom_call.1} parent=1 // pred_fallthru
      _
    // Predicated region
    $region10: #{tpu_custom_call.1} parent=1 // pred_check
      _
    $region11: #{tpu_custom_call.1} parent=1 // pred_check_branch
      %16 = sbr.rel (0) target = $region13
    $region12: #{tpu_custom_call.1} parent=1 // pred_region
      _
    $region13: #{tpu_custom_call.1} parent=1 // pred_fallthru
      _
    // Predicated region
    $region14: #{tpu_custom_call.1} parent=1 // pred_check
      _
    $region15: #{tpu_custom_call.1} parent=1 // pred_check_branch
      %18 = sbr.rel (0) target = $region17
    $region16: #{tpu_custom_call.1} parent=1 // pred_region
      _
    $region17: #{tpu_custom_call.1} parent=1 // pred_fallthru
      _
    // Predicated region
    $region18: #{tpu_custom_call.1} parent=1 // pred_check
      _
    $region19: #{tpu_custom_call.1} parent=1 // pred_check_branch
      %20 = sbr.rel (0) target = $region21
    $region20: #{tpu_custom_call.1} parent=1 // pred_region
      _
    $region21: #{tpu_custom_call.1} parent=1 // pred_fallthru
      _
    %v22 = vld [vmem:[%s0] sm:$0xff]
    %v23 = vld [vmem:[%s0 + $0x8] sm:$0x3f]
    %v26 = vcombine.high %v22, %v22
    %v28 = vunpack.c.l.s4 1983009808
    %v29 = vunpack.c.0.s8 %v28
    %v30 = vlaneseq
    %v31 = vshrl.u32 %v30, 7
    %v32 = vsub.s32 %v29, %v31
    %v33 = vrot.slane %v22, %v32
    %v35 = vunpack.c.l.s4 1983009808
    %v36 = vunpack.c.0.s8 %v35
    %v37 = vlaneseq
    %v38 = vshrl.u32 %v37, 7
    %v39 = vsub.s32 %v36, %v38
    %v40 = vrot.slane %v26, %v39
    %v41 = vcombine.high %v33, %v33
    %v42 = vcombine.high %v40, %v40
    %v43 = vcombine.high %v23, %v23
    %v45 = vunpack.c.l.s4 1983009808
    %v46 = vunpack.c.0.s8 %v45
    %v47 = vlaneseq
    %v48 = vshrl.u32 %v47, 7
    %v49 = vsub.s32 %v46, %v48
    %v50 = vrot.slane %v23, %v49
    %v52 = vunpack.c.l.s4 1983009808
    %v53 = vunpack.c.0.s8 %v52
    %v54 = vlaneseq
    %v55 = vshrl.u32 %v54, 7
    %v56 = vsub.s32 %v53, %v55
    %v57 = vrot.slane %v43, %v56
    %v58 = vcombine.high %v50, %v50
    %v66 = vpack.c.bf16 %v33, %v33
    %v67 = vpack.c.bf16 %v41, %v41
    %v68 = vpack.c.bf16 %v40, %v40
    %v69 = vpack.c.bf16 %v42, %v42
    %v70 = vpack.c.bf16 %v50, %v50
    %v71 = vpack.c.bf16 %v58, %v58
    %v72 = vpack.c.bf16 %v57, %v57
    %v73 = vld [vmem:[%s1] sm:$0xf]
    %v74 = vld [vmem:[%s1 + $0x4] sm:$0xf]
    %v75 = vld [vmem:[%s1 + $0x8] sm:$0xf]
    %v76 = vld [vmem:[%s1 + $0xc] sm:$0xf]
    %v77 = vld [vmem:[%s1 + $0x10] sm:$0xf]
    %v78 = vld [vmem:[%s1 + $0x14] sm:$0xf]
    %v79 = vld [vmem:[%s1 + $0x18] sm:$0xf]
    %v80 = vld [vmem:[%s1 + $0x1c] sm:$0xf]
    %v81 = vld [vmem:[%s1 + $0x20] sm:$0xf]
    %v82 = vld [vmem:[%s1 + $0x24] sm:$0xf]
    %v83 = vld [vmem:[%s1 + $0x28] sm:$0xf]
    %v84 = vld [vmem:[%s1 + $0x2c] sm:$0xf]
    %v85 = vld [vmem:[%s1 + $0x30] sm:$0xf]
    %v86 = vld [vmem:[%s1 + $0x34] sm:$0xf]
    %v87 = vld [vmem:[%s1 + $0x38] sm:$0xf]
    %v88 = vld [vmem:[%s1 + $0x3c] sm:$0xf]
    %v89 = vld [vmem:[%s1 + $0x40] sm:$0xf]
    %v90 = vld [vmem:[%s1 + $0x44] sm:$0xf]
    %v91 = vld [vmem:[%s1 + $0x48] sm:$0xf]
    %v92 = vld [vmem:[%s1 + $0x4c] sm:$0xf]
    %v93 = vld [vmem:[%s1 + $0x50] sm:$0xf]
    %v94 = vld [vmem:[%s1 + $0x54] sm:$0xf]
    %v95 = vld [vmem:[%s1 + $0x58] sm:$0xf]
    %v96 = vld [vmem:[%s1 + $0x5c] sm:$0xf]
    %v97 = vld [vmem:[%s1 + $0x60] sm:$0xf]
    %v98 = vld [vmem:[%s1 + $0x64] sm:$0xf]
    %v99 = vld [vmem:[%s1 + $0x68] sm:$0xf]
    %v100 = vld [vmem:[%s1 + $0x6c] sm:$0xf]
    %v101 = vld [vmem:[%s1 + $0x70] sm:$0xf]
    %v102 = vld [vmem:[%s1 + $0x74] sm:$0xf]
    %v103 = vld [vmem:[%s1 + $0x78] sm:$0xf]
    %v104 = vld [vmem:[%s1 + $0x7c] sm:$0xf]
    %v105 = vld [vmem:[%s1 + $0x80] sm:$0xf]
    %v106 = vld [vmem:[%s1 + $0x84] sm:$0xf]
    %v107 = vld [vmem:[%s1 + $0x88] sm:$0xf]
    %v108 = vld [vmem:[%s1 + $0x8c] sm:$0xf]
    %v109 = vld [vmem:[%s1 + $0x90] sm:$0xf]
    %v110 = vld [vmem:[%s1 + $0x94] sm:$0xf]
    %v111 = vld [vmem:[%s1 + $0x98] sm:$0xf]
    %v112 = vld [vmem:[%s1 + $0x9c] sm:$0xf]
    %v113 = vld [vmem:[%s1 + $0xa0] sm:$0xf]
    %v114 = vld [vmem:[%s1 + $0xa4] sm:$0xf]
    %v115 = vld [vmem:[%s1 + $0xa8] sm:$0xf]
    %v116 = vld [vmem:[%s1 + $0xac] sm:$0xf]
    %v117 = vld [vmem:[%s1 + $0xb0] sm:$0xf]
    %v118 = vld [vmem:[%s1 + $0xb4] sm:$0xf]
    %v119 = vld [vmem:[%s1 + $0xb8] sm:$0xf]
    %v120 = vld [vmem:[%s1 + $0xbc] sm:$0xf]
    %v121 = vld [vmem:[%s1 + $0xc0] sm:$0xf]
    %v122 = vld [vmem:[%s1 + $0xc4] sm:$0xf]
    %v123 = vld [vmem:[%s1 + $0xc8] sm:$0xf]
    %v124 = vld [vmem:[%s1 + $0xcc] sm:$0xf]
    %v125 = vld [vmem:[%s1 + $0xd0] sm:$0xf]
    %v126 = vld [vmem:[%s1 + $0xd4] sm:$0xf]
    %v127 = vld [vmem:[%s1 + $0xd8] sm:$0xf]
    %v128 = vld [vmem:[%s1 + $0xdc] sm:$0xf]
    %v129 = vld [vmem:[%s1 + $0xe0] sm:$0xf]
    %v130 = vld [vmem:[%s1 + $0xe4] sm:$0xf]
    %v131 = vld [vmem:[%s1 + $0xe8] sm:$0xf]
    %v132 = vld [vmem:[%s1 + $0xec] sm:$0xf]
    %v133 = vld [vmem:[%s1 + $0xf0] sm:$0xf]
    %v134 = vld [vmem:[%s1 + $0xf4] sm:$0xf]
    %v135 = vld [vmem:[%s1 + $0xf8] sm:$0xf]
    %v136 = vld [vmem:[%s1 + $0xfc] sm:$0xf]
    %v137 = vld [vmem:[%s1 + $0x100] sm:$0xf]
    %v138 = vld [vmem:[%s1 + $0x104] sm:$0xf]
    %v139 = vld [vmem:[%s1 + $0x108] sm:$0xf]
    %v140 = vld [vmem:[%s1 + $0x10c] sm:$0xf]
    %v141 = vld [vmem:[%s1 + $0x110] sm:$0xf]
    %v142 = vld [vmem:[%s1 + $0x114] sm:$0xf]
    %v143 = vld [vmem:[%s1 + $0x118] sm:$0xf]
    %v144 = vld [vmem:[%s1 + $0x11c] sm:$0xf]
    %v145 = vld [vmem:[%s1 + $0x120] sm:$0xf]
    %v146 = vld [vmem:[%s1 + $0x124] sm:$0xf]
    %v147 = vld [vmem:[%s1 + $0x128] sm:$0xf]
    %v148 = vld [vmem:[%s1 + $0x12c] sm:$0xf]
    %v149 = vld [vmem:[%s1 + $0x130] sm:$0xf]
    %v150 = vld [vmem:[%s1 + $0x134] sm:$0xf]
    %v151 = vld [vmem:[%s1 + $0x138] sm:$0xf]
    %v152 = vld [vmem:[%s1 + $0x13c] sm:$0xf]
    %v153 = vld [vmem:[%s1 + $0x140] sm:$0xf]
    %v154 = vld [vmem:[%s1 + $0x144] sm:$0xf]
    %v155 = vld [vmem:[%s1 + $0x148] sm:$0xf]
    %v156 = vld [vmem:[%s1 + $0x14c] sm:$0xf]
    %v157 = vld [vmem:[%s1 + $0x150] sm:$0xf]
    %v158 = vld [vmem:[%s1 + $0x154] sm:$0xf]
    %v159 = vld [vmem:[%s1 + $0x158] sm:$0xf]
    %v160 = vld [vmem:[%s1 + $0x15c] sm:$0xf]
    %v161 = vld [vmem:[%s1 + $0x160] sm:$0xf]
    %v162 = vld [vmem:[%s1 + $0x164] sm:$0xf]
    %v163 = vld [vmem:[%s1 + $0x168] sm:$0xf]
    %v164 = vld [vmem:[%s1 + $0x16c] sm:$0xf]
    %v165 = vld [vmem:[%s1 + $0x170] sm:$0xf]
    %v166 = vld [vmem:[%s1 + $0x174] sm:$0xf]
    %v167 = vld [vmem:[%s1 + $0x178] sm:$0xf]
    %v168 = vld [vmem:[%s1 + $0x17c] sm:$0xf]
    %v169 = vld [vmem:[%s1 + $0x180] sm:$0xf]
    %v170 = vld [vmem:[%s1 + $0x184] sm:$0xf]
    %v171 = vld [vmem:[%s2] sm:$0x1]
    %v173 = vlaneseq
    %v174 = vshrl.u32 %v173, 7
    %v175 = vsub.s32 0, %v174
    %v176 = vrot.slane %v171, %v175
    %v276 = vunpack.c.l.b16 %v73
    %v277 = vunpack.c.l.b16 %v74
    %v278 = vunpack.c.l.b16 %v75
    %v279 = vunpack.c.l.b16 %v76
    %v280 = vunpack.c.l.b16 %v77
    %v281 = vunpack.c.l.b16 %v78
    %v282 = vunpack.c.l.b16 %v79
    %v283 = vunpack.c.l.b16 %v80
    %v284 = vunpack.c.l.b16 %v81
    %v285 = vunpack.c.l.b16 %v82
    %v286 = vunpack.c.l.b16 %v83
    %v287 = vunpack.c.l.b16 %v84
    %v288 = vunpack.c.l.b16 %v85
    %v289 = vunpack.c.l.b16 %v86
    %v290 = vunpack.c.l.b16 %v87
    %v291 = vunpack.c.l.b16 %v88
    %v292 = vunpack.c.l.b16 %v89
    %v293 = vunpack.c.l.b16 %v90
    %v294 = vunpack.c.l.b16 %v91
    %v295 = vunpack.c.l.b16 %v92
    %v296 = vunpack.c.l.b16 %v93
    %v297 = vunpack.c.l.b16 %v94
    %v298 = vunpack.c.l.b16 %v95
    %v299 = vunpack.c.l.b16 %v96
    %v300 = vunpack.c.l.b16 %v97
    %v301 = vunpack.c.l.b16 %v98
    %v302 = vunpack.c.l.b16 %v99
    %v303 = vunpack.c.l.b16 %v100
    %v304 = vunpack.c.l.b16 %v101
    %v305 = vunpack.c.l.b16 %v102
    %v306 = vunpack.c.l.b16 %v103
    %v307 = vunpack.c.l.b16 %v104
    %v308 = vunpack.c.l.b16 %v105
    %v309 = vunpack.c.l.b16 %v106
    %v310 = vunpack.c.l.b16 %v107
    %v311 = vunpack.c.l.b16 %v108
    %v312 = vunpack.c.l.b16 %v109
    %v313 = vunpack.c.l.b16 %v110
    %v314 = vunpack.c.l.b16 %v111
    %v315 = vunpack.c.l.b16 %v112
    %v316 = vunpack.c.l.b16 %v113
    %v317 = vunpack.c.l.b16 %v114
    %v318 = vunpack.c.l.b16 %v115
    %v319 = vunpack.c.l.b16 %v116
    %v320 = vunpack.c.l.b16 %v117
    %v321 = vunpack.c.l.b16 %v118
    %v322 = vunpack.c.l.b16 %v119
    %v323 = vunpack.c.l.b16 %v120
    %v324 = vunpack.c.l.b16 %v121
    %v325 = vunpack.c.l.b16 %v122
    %v326 = vunpack.c.l.b16 %v123
    %v327 = vunpack.c.l.b16 %v124
    %v328 = vunpack.c.l.b16 %v125
    %v329 = vunpack.c.l.b16 %v126
    %v330 = vunpack.c.l.b16 %v127
    %v331 = vunpack.c.l.b16 %v128
    %v332 = vunpack.c.l.b16 %v129
    %v333 = vunpack.c.l.b16 %v130
    %v334 = vunpack.c.l.b16 %v131
    %v335 = vunpack.c.l.b16 %v132
    %v336 = vunpack.c.l.b16 %v133
    %v337 = vunpack.c.l.b16 %v134
    %v338 = vunpack.c.l.b16 %v135
    %v339 = vunpack.c.l.b16 %v136
    %v340 = vunpack.c.l.b16 %v137
    %v341 = vunpack.c.l.b16 %v138
    %v342 = vunpack.c.l.b16 %v139
    %v343 = vunpack.c.l.b16 %v140
    %v344 = vunpack.c.l.b16 %v141
    %v345 = vunpack.c.l.b16 %v142
    %v346 = vunpack.c.l.b16 %v143
    %v347 = vunpack.c.l.b16 %v144
    %v348 = vunpack.c.l.b16 %v145
    %v349 = vunpack.c.l.b16 %v146
    %v350 = vunpack.c.l.b16 %v147
    %v351 = vunpack.c.l.b16 %v148
    %v352 = vunpack.c.l.b16 %v149
    %v353 = vunpack.c.l.b16 %v150
    %v354 = vunpack.c.l.b16 %v151
    %v355 = vunpack.c.l.b16 %v152
    %v356 = vunpack.c.l.b16 %v153
    %v357 = vunpack.c.l.b16 %v154
    %v358 = vunpack.c.l.b16 %v155
    %v359 = vunpack.c.l.b16 %v156
    %v360 = vunpack.c.l.b16 %v157
    %v361 = vunpack.c.l.b16 %v158
    %v362 = vunpack.c.l.b16 %v159
    %v363 = vunpack.c.l.b16 %v160
    %v364 = vunpack.c.l.b16 %v161
    %v365 = vunpack.c.l.b16 %v162
    %v366 = vunpack.c.l.b16 %v163
    %v367 = vunpack.c.l.b16 %v164
    %v368 = vunpack.c.l.b16 %v165
    %v369 = vunpack.c.l.b16 %v166
    %v370 = vunpack.c.l.b16 %v167
    %v371 = vunpack.c.l.b16 %v168
    %v372 = vunpack.c.l.b16 %v169
    %v373 = vunpack.c.l.b16 %v170
    %v374 = vpack.c.b16 %v277, %v276
    %v375 = vpack.c.b16 %v279, %v278
    %v376 = vpack.c.b16 %v281, %v280
    %v377 = vpack.c.b16 %v283, %v282
    %v378 = vpack.c.b16 %v285, %v284
    %v379 = vpack.c.b16 %v287, %v286
    %v380 = vpack.c.b16 %v289, %v288
    %v381 = vpack.c.b16 %v291, %v290
    %v382 = vpack.c.b16 %v293, %v292
    %v383 = vpack.c.b16 %v295, %v294
    %v384 = vpack.c.b16 %v297, %v296
    %v385 = vpack.c.b16 %v299, %v298
    %v386 = vpack.c.b16 %v301, %v300
    %v387 = vpack.c.b16 %v303, %v302
    %v388 = vpack.c.b16 %v305, %v304
    %v389 = vpack.c.b16 %v307, %v306
    %v390 = vpack.c.b16 %v309, %v308
    %v391 = vpack.c.b16 %v311, %v310
    %v392 = vpack.c.b16 %v313, %v312
    %v393 = vpack.c.b16 %v315, %v314
    %v394 = vpack.c.b16 %v317, %v316
    %v395 = vpack.c.b16 %v319, %v318
    %v396 = vpack.c.b16 %v321, %v320
    %v397 = vpack.c.b16 %v323, %v322
    %v398 = vpack.c.b16 %v325, %v324
    %v399 = vpack.c.b16 %v327, %v326
    %v400 = vpack.c.b16 %v329, %v328
    %v401 = vpack.c.b16 %v331, %v330
    %v402 = vpack.c.b16 %v333, %v332
    %v403 = vpack.c.b16 %v335, %v334
    %v404 = vpack.c.b16 %v337, %v336
    %v405 = vpack.c.b16 %v339, %v338
    %v406 = vpack.c.b16 %v341, %v340
    %v407 = vpack.c.b16 %v343, %v342
    %v408 = vpack.c.b16 %v345, %v344
    %v409 = vpack.c.b16 %v347, %v346
    %v410 = vpack.c.b16 %v349, %v348
    %v411 = vpack.c.b16 %v351, %v350
    %v412 = vpack.c.b16 %v353, %v352
    %v413 = vpack.c.b16 %v355, %v354
    %v414 = vpack.c.b16 %v357, %v356
    %v415 = vpack.c.b16 %v359, %v358
    %v416 = vpack.c.b16 %v361, %v360
    %v417 = vpack.c.b16 %v363, %v362
    %v418 = vpack.c.b16 %v365, %v364
    %v419 = vpack.c.b16 %v367, %v366
    %v420 = vpack.c.b16 %v369, %v368
    %v421 = vpack.c.b16 %v371, %v370
    %v422 = vpack.c.b16 %v373, %v372
    %vm472 = vcmask 130048
    %v474 = vsel %vm472, %v72, 0
    %476 = vmatprep.subr.bf16.mxu0 0
    %477 = vmatpush1.bf16.msra.mxu0 %v374
    %478 = vmatprep.subr.bf16.mxu0 0
    %479 = vmatpush1.bf16.msra.mxu0 %v375
    %480 = vmatprep.subr.bf16.mxu0 0
    %481 = vmatpush1.bf16.msra.mxu0 %v376
    %482 = vmatprep.subr.bf16.mxu0 0
    %483 = vmatpush1.bf16.msra.mxu0 %v377
    %484 = vmatprep.subr.bf16.mxu0 0
    %485 = vmatpush1.bf16.msra.mxu0 %v378
    %486 = vmatprep.subr.bf16.mxu0 0
    %487 = vmatpush1.bf16.msra.mxu0 %v379
    %488 = vmatprep.subr.bf16.mxu0 0
    %489 = vmatpush1.bf16.msra.mxu0 %v380
    %490 = vmatprep.subr.bf16.mxu0 0
    %491 = vmatpush1.bf16.msra.mxu0 %v381
    %492 = vmatprep.subr.bf16.mxu0 0
    %493 = vmatpush1.bf16.msra.mxu0 %v382
    %494 = vmatprep.subr.bf16.mxu0 0
    %495 = vmatpush1.bf16.msra.mxu0 %v383
    %496 = vmatprep.subr.bf16.mxu0 0
    %497 = vmatpush1.bf16.msra.mxu0 %v384
    %498 = vmatprep.subr.bf16.mxu0 0
    %499 = vmatpush1.bf16.msra.mxu0 %v385
    %500 = vmatprep.subr.bf16.mxu0 0
    %501 = vmatpush1.bf16.msra.mxu0 %v386
    %502 = vmatprep.subr.bf16.mxu0 0
    %503 = vmatpush1.bf16.msra.mxu0 %v387
    %504 = vmatprep.subr.bf16.mxu0 0
    %505 = vmatpush1.bf16.msra.mxu0 %v388
    %506 = vmatprep.subr.bf16.mxu0 0
    %507 = vmatpush1.bf16.msra.mxu0 %v389
    %508 = vmatprep.mubr.bf16.mxu0 %v67
    %509 = vmatmul.mubr.bf16.gmra.mrb[0].mxu0 %v66
    %v510 = vpop.f32.mrb[0].mxu0
    %v511 = vadd.f32 %v176, %v510
    %v512 = vpop.f32.mrb[0].mxu0
    %v513 = vpop.f32.mrb[0].mxu0
    %v514 = vpop.f32.mrb[0].mxu0
    %515 = vdwg.mxu0
    %516 = vmatprep.subr.bf16.mxu0 0
    %517 = vmatpush1.bf16.msra.mxu0 %v390
    %518 = vmatprep.subr.bf16.mxu0 0
    %519 = vmatpush1.bf16.msra.mxu0 %v391
    %520 = vmatprep.subr.bf16.mxu0 0
    %521 = vmatpush1.bf16.msra.mxu0 %v392
    %522 = vmatprep.subr.bf16.mxu0 0
    %523 = vmatpush1.bf16.msra.mxu0 %v393
    %524 = vmatprep.subr.bf16.mxu0 0
    %525 = vmatpush1.bf16.msra.mxu0 %v394
    %526 = vmatprep.subr.bf16.mxu0 0
    %527 = vmatpush1.bf16.msra.mxu0 %v395
    %528 = vmatprep.subr.bf16.mxu0 0
    %529 = vmatpush1.bf16.msra.mxu0 %v396
    %530 = vmatprep.subr.bf16.mxu0 0
    %531 = vmatpush1.bf16.msra.mxu0 %v397
    %532 = vmatprep.subr.bf16.mxu0 0
    %533 = vmatpush1.bf16.msra.mxu0 %v398
    %534 = vmatprep.subr.bf16.mxu0 0
    %535 = vmatpush1.bf16.msra.mxu0 %v399
    %536 = vmatprep.subr.bf16.mxu0 0
    %537 = vmatpush1.bf16.msra.mxu0 %v400
    %538 = vmatprep.subr.bf16.mxu0 0
    %539 = vmatpush1.bf16.msra.mxu0 %v401
    %540 = vmatprep.subr.bf16.mxu0 0
    %541 = vmatpush1.bf16.msra.mxu0 %v402
    %542 = vmatprep.subr.bf16.mxu0 0
    %543 = vmatpush1.bf16.msra.mxu0 %v403
    %544 = vmatprep.subr.bf16.mxu0 0
    %545 = vmatpush1.bf16.msra.mxu0 %v404
    %546 = vmatprep.subr.bf16.mxu0 0
    %547 = vmatpush1.bf16.msra.mxu0 %v405
    %548 = vmatprep.mubr.bf16.mxu0 %v69
    %549 = vmatmul.mubr.bf16.gmra.mrb[0].mxu0 %v68
    %v550 = vpop.f32.mrb[0].mxu0
    %v551 = vadd.f32 %v511, %v550
    %v552 = vpop.f32.mrb[0].mxu0
    %v553 = vpop.f32.mrb[0].mxu0
    %v554 = vpop.f32.mrb[0].mxu0
    %555 = vdwg.mxu0
    %556 = vmatprep.subr.bf16.mxu0 0
    %557 = vmatpush1.bf16.msra.mxu0 %v406
    %558 = vmatprep.subr.bf16.mxu0 0
    %559 = vmatpush1.bf16.msra.mxu0 %v407
    %560 = vmatprep.subr.bf16.mxu0 0
    %561 = vmatpush1.bf16.msra.mxu0 %v408
    %562 = vmatprep.subr.bf16.mxu0 0
    %563 = vmatpush1.bf16.msra.mxu0 %v409
    %564 = vmatprep.subr.bf16.mxu0 0
    %565 = vmatpush1.bf16.msra.mxu0 %v410
    %566 = vmatprep.subr.bf16.mxu0 0
    %567 = vmatpush1.bf16.msra.mxu0 %v411
    %568 = vmatprep.subr.bf16.mxu0 0
    %569 = vmatpush1.bf16.msra.mxu0 %v412
    %570 = vmatprep.subr.bf16.mxu0 0
    %571 = vmatpush1.bf16.msra.mxu0 %v413
    %572 = vmatprep.subr.bf16.mxu0 0
    %573 = vmatpush1.bf16.msra.mxu0 %v414
    %574 = vmatprep.subr.bf16.mxu0 0
    %575 = vmatpush1.bf16.msra.mxu0 %v415
    %576 = vmatprep.subr.bf16.mxu0 0
    %577 = vmatpush1.bf16.msra.mxu0 %v416
    %578 = vmatprep.subr.bf16.mxu0 0
    %579 = vmatpush1.bf16.msra.mxu0 %v417
    %580 = vmatprep.subr.bf16.mxu0 0
    %581 = vmatpush1.bf16.msra.mxu0 %v418
    %582 = vmatprep.subr.bf16.mxu0 0
    %583 = vmatpush1.bf16.msra.mxu0 %v419
    %584 = vmatprep.subr.bf16.mxu0 0
    %585 = vmatpush1.bf16.msra.mxu0 %v420
    %586 = vmatprep.subr.bf16.mxu0 0
    %587 = vmatpush1.bf16.msra.mxu0 %v421
    %588 = vmatprep.mubr.bf16.mxu0 %v71
    %589 = vmatmul.mubr.bf16.gmra.mrb[0].mxu0 %v70
    %v590 = vpop.f32.mrb[0].mxu0
    %v591 = vadd.f32 %v551, %v590
    %v592 = vpop.f32.mrb[0].mxu0
    %v593 = vpop.f32.mrb[0].mxu0
    %v594 = vpop.f32.mrb[0].mxu0
    %595 = vdwg.mxu0
    %596 = vmatprep.subr.bf16.mxu0 0
    %597 = vmatpush1.bf16.msra.mxu0 %v422
    %598 = vmatprep.subr.bf16.mxu0 0
    %599 = vmatpush1.bf16.msra.mxu0 0
    %600 = vmatprep.subr.bf16.mxu0 0
    %601 = vmatpush1.bf16.msra.mxu0 0
    %602 = vmatprep.subr.bf16.mxu0 0
    %603 = vmatpush1.bf16.msra.mxu0 0
    %604 = vmatprep.subr.bf16.mxu0 0
    %605 = vmatpush1.bf16.msra.mxu0 0
    %606 = vmatprep.subr.bf16.mxu0 0
    %607 = vmatpush1.bf16.msra.mxu0 0
    %608 = vmatprep.subr.bf16.mxu0 0
    %609 = vmatpush1.bf16.msra.mxu0 0
    %610 = vmatprep.subr.bf16.mxu0 0
    %611 = vmatpush1.bf16.msra.mxu0 0
    %612 = vmatprep.subr.bf16.mxu0 0
    %613 = vmatpush1.bf16.msra.mxu0 0
    %614 = vmatprep.subr.bf16.mxu0 0
    %615 = vmatpush1.bf16.msra.mxu0 0
    %616 = vmatprep.subr.bf16.mxu0 0
    %617 = vmatpush1.bf16.msra.mxu0 0
    %618 = vmatprep.subr.bf16.mxu0 0
    %619 = vmatpush1.bf16.msra.mxu0 0
    %620 = vmatprep.subr.bf16.mxu0 0
    %621 = vmatpush1.bf16.msra.mxu0 0
    %622 = vmatprep.subr.bf16.mxu0 0
    %623 = vmatpush1.bf16.msra.mxu0 0
    %624 = vmatprep.subr.bf16.mxu0 0
    %625 = vmatpush1.bf16.msra.mxu0 0
    %626 = vmatprep.subr.bf16.mxu0 0
    %627 = vmatpush1.bf16.msra.mxu0 0
    %628 = vmatprep.mubr.bf16.mxu0 0
    %629 = vmatmul.mubr.bf16.gmra.mrb[0].mxu0 %v474
    %v630 = vpop.f32.mrb[0].mxu0
    %v631 = vadd.f32 %v591, %v630
    %v632 = vpop.f32.mrb[0].mxu0
    %v633 = vpop.f32.mrb[0].mxu0
    %v634 = vpop.f32.mrb[0].mxu0
    %635 = vdwg.mxu0
    %v636 = vmax.f32 %v631, 0.0
    %v637 = vld [vmem:[%s3] sm:$0xff]
    %v638 = vld [vmem:[%s3 + $0x8] sm:$0xff]
    %v639 = vld [vmem:[%s3 + $0x10] sm:$0xff]
    %v640 = vld [vmem:[%s3 + $0x18] sm:$0xff]
    %v641 = vld [vmem:[%s3 + $0x20] sm:$0xff]
    %v642 = vld [vmem:[%s3 + $0x28] sm:$0xff]
    %v643 = vld [vmem:[%s3 + $0x30] sm:$0xff]
    %v644 = vld [vmem:[%s3 + $0x38] sm:$0xff]
    %v645 = vld [vmem:[%s4] sm:$0x1]
    %v647 = vlaneseq
    %v648 = vshrl.u32 %v647, 7
    %v649 = vsub.s32 0, %v648
    %v650 = vrot.slane %v645, %v649
    %vm652 = vcmask 523264
    %v654 = vsel %vm652, %v636, 0
    %656 = vmatprep.subr.mxu0 0.0
    %657 = vmatpush1.msra.mxu0 %v637
    %658 = vmatprep.subr.mxu0 0.0
    %659 = vmatpush1.msra.mxu0 %v638
    %660 = vmatprep.subr.mxu0 0.0
    %661 = vmatpush1.msra.mxu0 %v639
    %662 = vmatprep.subr.mxu0 0.0
    %663 = vmatpush1.msra.mxu0 %v640
    %664 = vmatprep.subr.mxu0 0.0
    %665 = vmatpush1.msra.mxu0 %v641
    %666 = vmatprep.subr.mxu0 0.0
    %667 = vmatpush1.msra.mxu0 %v642
    %668 = vmatprep.subr.mxu0 0.0
    %669 = vmatpush1.msra.mxu0 %v643
    %670 = vmatprep.subr.mxu0 0.0
    %671 = vmatpush1.msra.mxu0 %v644
    %672 = vmatprep.subr.mxu0 0.0
    %673 = vmatpush1.msra.mxu0 0.0
    %674 = vmatprep.subr.mxu0 0.0
    %675 = vmatpush1.msra.mxu0 0.0
    %676 = vmatprep.subr.mxu0 0.0
    %677 = vmatpush1.msra.mxu0 0.0
    %678 = vmatprep.subr.mxu0 0.0
    %679 = vmatpush1.msra.mxu0 0.0
    %680 = vmatprep.subr.mxu0 0.0
    %681 = vmatpush1.msra.mxu0 0.0
    %682 = vmatprep.subr.mxu0 0.0
    %683 = vmatpush1.msra.mxu0 0.0
    %684 = vmatprep.subr.mxu0 0.0
    %685 = vmatpush1.msra.mxu0 0.0
    %686 = vmatprep.subr.mxu0 0.0
    %687 = vmatpush1.msra.mxu0 0.0
    %688 = vmatprep.subr.mxu0 0.0
    %689 = vmatpush1.msra.mxu0 0.0
    %690 = vmatprep.subr.mxu0 0.0
    %691 = vmatpush1.msra.mxu0 0.0
    %692 = vmatprep.subr.mxu0 0.0
    %693 = vmatpush1.msra.mxu0 0.0
    %694 = vmatprep.subr.mxu0 0.0
    %695 = vmatpush1.msra.mxu0 0.0
    %696 = vmatprep.subr.mxu0 0.0
    %697 = vmatpush1.msra.mxu0 0.0
    %698 = vmatprep.subr.mxu0 0.0
    %699 = vmatpush1.msra.mxu0 0.0
    %700 = vmatprep.subr.mxu0 0.0
    %701 = vmatpush1.msra.mxu0 0.0
    %702 = vmatprep.subr.mxu0 0.0
    %703 = vmatpush1.msra.mxu0 0.0
    %704 = vmatprep.subr.mxu0 0.0
    %705 = vmatpush1.msra.mxu0 0.0
    %706 = vmatprep.subr.mxu0 0.0
    %707 = vmatpush1.msra.mxu0 0.0
    %708 = vmatprep.subr.mxu0 0.0
    %709 = vmatpush1.msra.mxu0 0.0
    %710 = vmatprep.subr.mxu0 0.0
    %711 = vmatpush1.msra.mxu0 0.0
    %712 = vmatprep.subr.mxu0 0.0
    %713 = vmatpush1.msra.mxu0 0.0
    %714 = vmatprep.subr.mxu0 0.0
    %715 = vmatpush1.msra.mxu0 0.0
    %716 = vmatprep.subr.mxu0 0.0
    %717 = vmatpush1.msra.mxu0 0.0
    %718 = vmatprep.subr.mxu0 0.0
    %719 = vmatpush1.msra.mxu0 0.0
    %720 = vmatprep.mubr.f32.mxu0 0.0
    %721 = vmatmul.mubr.f32.gmra.mrb[0].mxu0 %v654
    %v722 = vpop.f32.mrb[0].mxu0
    %v723 = vadd.f32 %v650, %v722
    %v724 = vpop.f32.mrb[0].mxu0
    %725 = vdwg.mxu0
    %vm726 = vcmask 74752
    %v727 = vsel %vm726, %v723, -inf
    %728 = vmax.xlane.f32.xlu0 %v727
    %v729 = vpop.xlane.xlu0 %728
    %v730 = vsub.f32 %v723, %v729
    %v731 = vmul.f32 %v730, 1.442695
    %v732 = vpow.pop %v731
    %v733 = vsel %vm726, %v732, 0.0
    %734 = vadd.xlane.f32.xlu0 %v733
    %v735 = vpop.xlane.xlu0 %734
    %v736 = vrcp.pop %v735
    %v737 = vmul.f32 %v732, %v736
    %738 = vst.msk [vmem:[#allocation2] sm:$0x3] %vm726, %v737
    // Predicated region
    $region22: #{tpu_custom_call.1} parent=1 // pred_check
      _
    $region23: #{tpu_custom_call.1} parent=1 // pred_check_branch
      %740 = sbr.rel (0) target = $region25
    $region24: #{tpu_custom_call.1} parent=1 // pred_region
      %s742 = ssub.s32 32, 32
      %743 = vsyncadd [#allocation3], %s742
      %s745 = sshll.u32 [#allocation2], 4
      %s746 = int_to_ptr.vmem [resolvable:$true] %s745
      %748 = dma.vmem_to_hbm [thread:$0]  %s746, 32, %s5, [#allocation3]
    $region25: #{tpu_custom_call.1} parent=1 // pred_fallthru
      _
    // Predicated region
    $region26: #{tpu_custom_call.1} parent=1 // pred_check
      _
    $region27: #{tpu_custom_call.1} parent=1 // pred_check_branch
      %750 = sbr.rel (0) target = $region29
    $region28: #{tpu_custom_call.1} parent=1 // pred_region
      %751 = dma.done [#allocation3], 32
    $region29: #{tpu_custom_call.1} parent=1 // pred_fallthru
      _
    %752 = vsyncpa [#allocation3], 1

</llo_original>
